<compile_context>
chip_gen: v6e
topology: v6e:2x2x1
jax: 0.10.0
libtpu: 0.0.40
codegen_flags: <defaults>
</compile_context>

<pallas_src>
import jax
import jax.numpy as jnp
from jax.experimental import pallas as pl
from jax.experimental.pallas import tpu as pltpu

EPS = 1e-6
_MAX_BLOCK_ROWS = 1024  # VMEM-safe row-tile cap for large inputs


def layer_norm_kernel(x_ref, gb_ref, o_ref):
    x = x_ref[...]                       # (block_rows, D) f32
    d = x.shape[-1]
    gamma = gb_ref[0:1, :]               # (1, D)
    beta = gb_ref[1:2, :]                # (1, D)

    mean = jnp.mean(x, axis=-1, keepdims=True)
    diff = x - mean
    # torch.std default: unbiased (N-1 divisor).
    var = jnp.sum(diff * diff, axis=-1, keepdims=True) * (1.0 / (d - 1))
    std = jnp.sqrt(var)
    # eps added to std OUTSIDE the sqrt (matches the custom module, not
    # torch.nn.LayerNorm). Reciprocal on the EUP, exact variant for numerics.
    inv = pl.reciprocal(std + EPS, approx=False)
    o_ref[...] = gamma * (diff * inv) + beta


def _round_up(a, m):
    return ((a + m - 1) // m) * m


def _num_row_blocks():
    # v7x has 2 TensorCores per chip -> give each core a row block.
    # On v5e/v6e (1 TC) an extra grid step is pure overhead, keep 1 block.
    try:
        kind = jax.devices()[0].device_kind.lower()
        return 2 if "v7" in kind else 1
    except Exception:
        return 1


def layer_norm(x, gamma, beta):
    """LayerNorm over the last dim of x (any leading shape), custom-module semantics."""
    orig_shape = x.shape
    orig_dtype = x.dtype
    d = orig_shape[-1]

    # Fold all leading dims into rows; kernel processes whole row tiles.
    xf = x.reshape(-1, d).astype(jnp.float32)
    n = xf.shape[0]

    # Pack gamma/beta into a single (2, D) constant input.
    gb = jnp.stack(
        [gamma.astype(jnp.float32).reshape(d), beta.astype(jnp.float32).reshape(d)]
    )

    nblk = _num_row_blocks()
    block_rows = min(_round_up(pl.cdiv(n, nblk), 8), _MAX_BLOCK_ROWS)
    grid = pl.cdiv(n, block_rows)
    n_pad = grid * block_rows
    if n_pad != n:
        # Padded rows are all-zero: diff == 0 -> output 0*inv + beta; discarded below.
        xf = jnp.pad(xf, ((0, n_pad - n), (0, 0)))

    out = pl.pallas_call(
        layer_norm_kernel,
        out_shape=jax.ShapeDtypeStruct((n_pad, d), jnp.float32),
        grid=(grid,),
        in_specs=[
            pl.BlockSpec((block_rows, d), lambda i: (i, 0)),  # activations (row tile)
            pl.BlockSpec((2, d), lambda i: (0, 0)),           # packed gamma/beta (resident)
        ],
        out_specs=pl.BlockSpec((block_rows, d), lambda i: (i, 0)),
        compiler_params=pltpu.CompilerParams(
            dimension_semantics=("parallel",)),
    )(xf, gb)

    return out[:n].reshape(orig_shape).astype(orig_dtype)


if __name__ == "__main__":
    key = jax.random.PRNGKey(0)
    B, S, D = 2, 8, 32  # small transformer-like shapes: batch=2, seq=8, d_model=32
    kx, kg, kb = jax.random.split(key, 3)

    x = jax.random.normal(kx, (B, S, D), jnp.float32)
    gamma = 1.0 + 0.1 * jax.random.normal(kg, (D,), jnp.float32)
    beta = 0.1 * jax.random.normal(kb, (D,), jnp.float32)

    out = layer_norm(x, gamma, beta)
    jax.block_until_ready(out)

    # Pure-JAX reference with identical semantics (unbiased std, eps outside sqrt).
    mean = jnp.mean(x, axis=-1, keepdims=True)
    var = jnp.sum((x - mean) ** 2, axis=-1, keepdims=True) / (D - 1)
    ref = gamma * (x - mean) / (jnp.sqrt(var) + EPS) + beta

    assert out.shape == (B, S, D)
    assert bool(jnp.allclose(out, ref, atol=1e-5, rtol=1e-5)), "mismatch vs reference"
    print("KERNEL_OK")
</pallas_src>

<mosaic_0001>
module attributes {stable_mosaic.version = 11 : i64} {
  func.func @layer_norm_kernel(%arg0: i32, %arg1: memref<16x32xf32, #tpu.memory_space<vmem>>, %arg2: memref<2x32xf32, #tpu.memory_space<vmem>>, %arg3: memref<16x32xf32, #tpu.memory_space<vmem>>) attributes {dimension_semantics = [#tpu.dimension_semantics<parallel>], iteration_bounds = array<i64: 1>, scalar_prefetch = 0 : i64, scratch_operands = 0 : i64, tpu.core_type = #tpu.core_type<tc>, window_params = [{transform_indices = @transform_0, window_bounds = array<i64: 16, 32>}, {pipeline_mode = #tpu.pipeline_mode<synchronous>, transform_indices = @transform_1, window_bounds = array<i64: 2, 32>}, {transform_indices = @transform_2, window_bounds = array<i64: 16, 32>}]} {
    %c0 = arith.constant 0 : index
    %c0_0 = arith.constant 0 : index
    %0 = vector.load %arg1[%c0, %c0_0] : memref<16x32xf32, #tpu.memory_space<vmem>>, vector<16x32xf32>
    %c0_1 = arith.constant 0 : index
    %c0_2 = arith.constant 0 : index
    %1 = vector.load %arg2[%c0_1, %c0_2] : memref<2x32xf32, #tpu.memory_space<vmem>>, vector<1x32xf32>
    %c1 = arith.constant 1 : index
    %c0_3 = arith.constant 0 : index
    %2 = vector.load %arg2[%c1, %c0_3] : memref<2x32xf32, #tpu.memory_space<vmem>>, vector<1x32xf32>
    %cst = arith.constant dense<0.000000e+00> : vector<16xf32>
    %3 = vector.multi_reduction <add>, %0, %cst [1] : vector<16x32xf32> to vector<16xf32>
    %4 = vector.shape_cast %3 : vector<16xf32> to vector<16x1xf32>
    %cst_4 = arith.constant 3.200000e+01 : f32
    %5 = vector.broadcast %cst_4 : f32 to vector<16x1xf32>
    %6 = arith.divf %4, %5 : vector<16x1xf32>
    %7 = vector.broadcast %6 : vector<16x1xf32> to vector<16x32xf32>
    %8 = arith.subf %0, %7 : vector<16x32xf32>
    %9 = arith.mulf %8, %8 : vector<16x32xf32>
    %cst_5 = arith.constant dense<0.000000e+00> : vector<16xf32>
    %10 = vector.multi_reduction <add>, %9, %cst_5 [1] : vector<16x32xf32> to vector<16xf32>
    %11 = vector.shape_cast %10 : vector<16xf32> to vector<16x1xf32>
    %cst_6 = arith.constant 0.0322580636 : f32
    %12 = vector.broadcast %cst_6 : f32 to vector<16x1xf32>
    %13 = arith.mulf %11, %12 : vector<16x1xf32>
    %14 = math.sqrt %13 : vector<16x1xf32>
    %cst_7 = arith.constant 9.99999997E-7 : f32
    %15 = vector.broadcast %cst_7 : f32 to vector<16x1xf32>
    %16 = arith.addf %14, %15 : vector<16x1xf32>
    %17 = tpu.reciprocal %16 : vector<16x1xf32> -> vector<16x1xf32>
    %18 = vector.broadcast %17 : vector<16x1xf32> to vector<16x32xf32>
    %19 = arith.mulf %8, %18 : vector<16x32xf32>
    %20 = vector.broadcast %1 : vector<1x32xf32> to vector<16x32xf32>
    %21 = arith.mulf %20, %19 : vector<16x32xf32>
    %22 = vector.broadcast %2 : vector<1x32xf32> to vector<16x32xf32>
    %23 = arith.addf %21, %22 : vector<16x32xf32>
    %c0_8 = arith.constant 0 : index
    %c0_9 = arith.constant 0 : index
    %24 = vector.load %arg3[%c0_8, %c0_9] : memref<16x32xf32, #tpu.memory_space<vmem>>, vector<16x32xf32>
    tpu.vector_store %arg3[%c0_8, %c0_9], %23 {strides = array<i32>} : memref<16x32xf32, #tpu.memory_space<vmem>>, vector<16x32xf32>,
    return
  }
  func.func @transform_0(%arg0: i32) -> (i32, i32) {
    %c0_i32 = arith.constant 0 : i32
    %c0_i32_0 = arith.constant 0 : i32
    return %arg0, %c0_i32 : i32, i32
  }
  func.func @transform_1(%arg0: i32) -> (i32, i32) {
    %c0_i32 = arith.constant 0 : i32
    %c0_i32_0 = arith.constant 0 : i32
    %c0_i32_1 = arith.constant 0 : i32
    return %c0_i32, %c0_i32_0 : i32, i32
  }
  func.func @transform_2(%arg0: i32) -> (i32, i32) {
    %c0_i32 = arith.constant 0 : i32
    %c0_i32_0 = arith.constant 0 : i32
    return %arg0, %c0_i32 : i32, i32
  }
}

</mosaic_0001>

<llo_original>
// kernel: tpu_custom_call.1
$region0: #{tpu_custom_call.1}
  #allocation0 [shape = 'u32[]', space=smem, size = 0x4, offset = 0x4, fixed_abs, tag = 'smem constant byte address 0x4 - core index']
  #allocation1 [shape = 'u32[144,128]{1,0:T(1,128)}', space=vmem, size = 0x12000, scoped, tag = 'internal scratch']
  %s0 = inlined_call_operand.hbm [shape: f32[16,32], index: 0, kind: input, shape index: {}]
  %s1 = inlined_call_operand.hbm [shape: f32[2,32], index: 1, kind: input, shape index: {}]
  %s2 = inlined_call_operand.hbm [shape: f32[16,32], index: 2, kind: output, shape index: {}]
  %s3 = sld [smem:[#allocation0]]
  $region26: #{tpu_custom_call.1} parent=0
    _
  %s5 = ssub.s32 1, %s3
  %s6 = scalar_select 0, %s5, %s3
  $region1: #{tpu_custom_call.1} parent=0
    #allocation2 [shape = 'u8[8192]{0}', space=vmem, size = 0x2000, scoped, tag = 'input window, operand 0, single buffered']
    #allocation3 [shape = 's32[1]{0}', space=sflag, size = 0x4, scoped, tag = 'scoped memory for tpu_custom_call.1']
    #allocation4 [shape = 's32[1]{0}', space=sflag, size = 0x4, scoped, tag = 'scoped memory for tpu_custom_call.1']
    #allocation5 [shape = 'u8[1024]{0}', space=vmem, size = 0x400, scoped, tag = 'input window, operand 1, single buffered']
    #allocation6 [shape = 's32[1]{0}', space=sflag, size = 0x4, scoped, tag = 'scoped memory for tpu_custom_call.1']
    #allocation7 [shape = 'u8[8192]{0}', space=vmem, size = 0x2000, scoped, tag = 'output window, operand 0, single buffered']
    %7 = vsyncpa [#allocation3], 0
    %8 = vsyncpa [#allocation6], 0
    %9 = vsyncpa [#allocation4], 0
    // Predicated region
    $region2: #{tpu_custom_call.1} parent=1 // pred_check
      _
    $region3: #{tpu_custom_call.1} parent=1 // pred_check_branch
      %11 = sbr.rel (0) target = $region5
    $region4: #{tpu_custom_call.1} parent=1 // pred_region
      %s13 = ssub.s32 256, 256
      %14 = vsyncadd [#allocation3], %s13
      %s15 = sshll.u32 [#allocation2], 4
      %s16 = int_to_ptr.vmem [resolvable:$true] %s15
      %21 = dma.hbm_to_vmem [thread:$0]  %s0, 256, %s16, [#allocation3], 128, 128, 8
    $region5: #{tpu_custom_call.1} parent=1 // pred_fallthru
      _
    // Predicated region
    $region6: #{tpu_custom_call.1} parent=1 // pred_check
      _
    $region7: #{tpu_custom_call.1} parent=1 // pred_check_branch
      %23 = sbr.rel (0) target = $region9
    $region8: #{tpu_custom_call.1} parent=1 // pred_region
      %s25 = ssub.s32 32, 32
      %26 = vsyncadd [#allocation6], %s25
      %s28 = sshll.u32 [#allocation5], 4
      %s29 = int_to_ptr.vmem [resolvable:$true] %s28
      %31 = dma.hbm_to_vmem [thread:$0]  %s1, 32, %s29, [#allocation6]
    $region9: #{tpu_custom_call.1} parent=1 // pred_fallthru
      _
    // Predicated region
    $region10: #{tpu_custom_call.1} parent=1 // pred_check
      _
    $region11: #{tpu_custom_call.1} parent=1 // pred_check_branch
      %33 = sbr.rel (0) target = $region13
    $region12: #{tpu_custom_call.1} parent=1 // pred_region
      %34 = dma.done [#allocation3], 256
    $region13: #{tpu_custom_call.1} parent=1 // pred_fallthru
      _
    // Predicated region
    $region14: #{tpu_custom_call.1} parent=1 // pred_check
      _
    $region15: #{tpu_custom_call.1} parent=1 // pred_check_branch
      %36 = sbr.rel (0) target = $region17
    $region16: #{tpu_custom_call.1} parent=1 // pred_region
      %37 = dma.done [#allocation6], 32
    $region17: #{tpu_custom_call.1} parent=1 // pred_fallthru
      _
    %v38 = vld [vmem:[#allocation2] sm:$0xff]
    %v39 = vld [vmem:[#allocation2 + $0x8] sm:$0xff]
    %v40 = vld [vmem:[#allocation5] sm:$0x1]
    %v41 = vld [vmem:[#allocation5 + $0x1] sm:$0x1]
    %vm42 = vcmask 261120
    %v43 = vsel %vm42, %v38, 0.0
    %44 = vadd.xlane.f32.xlu0 %v43
    %v45 = vpop.xlane.xlu0 %44
    %v46 = vsel %vm42, %v39, 0.0
    %47 = vadd.xlane.f32.xlu0 %v46
    %v48 = vpop.xlane.xlu0 %47
    %v49 = vrcp.pop 32.0
    %v50 = vmul.f32 %v45, %v49
    %v51 = vmul.f32 %v48, %v49
    %v52 = vsub.f32 %v38, %v50
    %v53 = vsub.f32 %v39, %v51
    %v54 = vmul.f32 %v52, %v52
    %v55 = vmul.f32 %v53, %v53
    %v56 = vsel %vm42, %v54, 0.0
    %57 = vadd.xlane.f32.xlu0 %v56
    %v58 = vpop.xlane.xlu0 %57
    %v59 = vsel %vm42, %v55, 0.0
    %60 = vadd.xlane.f32.xlu0 %v59
    %v61 = vpop.xlane.xlu0 %60
    %v62 = vmul.f32 %v58, 0.032258064
    %v63 = vmul.f32 %v61, 0.032258064
    %v64 = vrsqrt.pop %v62
    %v65 = vmul.f32 %v62, %v64
    %vm66 = vcmp.eq.f32.partialorder %v62, inf
    %v67 = vsel %vm66, %v62, %v65
    %vm68 = vcmp.eq.f32.partialorder %v62, 0.0
    %v69 = vand.u32 %v62, 2147483648
    %v70 = vsel %vm68, %v69, %v67
    %v71 = vrsqrt.pop %v63
    %v72 = vmul.f32 %v63, %v71
    %vm73 = vcmp.eq.f32.partialorder %v63, inf
    %v74 = vsel %vm73, %v63, %v72
    %vm75 = vcmp.eq.f32.partialorder %v63, 0.0
    %v76 = vand.u32 %v63, 2147483648
    %v77 = vsel %vm75, %v76, %v74
    %v78 = vadd.f32 %v70, 1e-06
    %v79 = vadd.f32 %v77, 1e-06
    %v80 = vrcp.pop %v78
    %v81 = vrcp.pop %v79
    %v82 = vmul.f32 %v52, %v80
    %v83 = vmul.f32 %v53, %v81
    %v84 = vlaneseq
    %v85 = vshrl.u32 %v84, 7
    %v86 = vsub.s32 0, %v85
    %v87 = vrot.slane %v40, %v86
    %v88 = vmul.f32 %v87, %v82
    %v89 = vmul.f32 %v87, %v83
    %v90 = vlaneseq
    %v91 = vshrl.u32 %v90, 7
    %v92 = vsub.s32 0, %v91
    %v93 = vrot.slane %v41, %v92
    %v94 = vadd.f32 %v88, %v93
    %v95 = vadd.f32 %v89, %v93
    %96 = vst.msk [vmem:[#allocation7] sm:$0xff] %vm42, %v94
    %97 = vst.msk [vmem:[#allocation7 + $0x8] sm:$0xff] %vm42, %v95
    // Predicated region
    $region18: #{tpu_custom_call.1} parent=1 // pred_check
      _
    $region19: #{tpu_custom_call.1} parent=1 // pred_check_branch
      %99 = sbr.rel (0) target = $region21
    $region20: #{tpu_custom_call.1} parent=1 // pred_region
      %s101 = ssub.s32 256, 256
      %102 = vsyncadd [#allocation4], %s101
      %s103 = sshll.u32 [#allocation7], 4
      %s104 = int_to_ptr.vmem [resolvable:$true] %s103
      %109 = dma.vmem_to_hbm [thread:$0]  %s104, 256, %s2, [#allocation4], 128, 128, 8
    $region21: #{tpu_custom_call.1} parent=1 // pred_fallthru
      _
    // Predicated region
    $region22: #{tpu_custom_call.1} parent=1 // pred_check
      _
    $region23: #{tpu_custom_call.1} parent=1 // pred_check_branch
      %111 = sbr.rel (0) target = $region25
    $region24: #{tpu_custom_call.1} parent=1 // pred_region
      %112 = dma.done [#allocation4], 256
    $region25: #{tpu_custom_call.1} parent=1 // pred_fallthru
      _
    %113 = vsyncpa [#allocation3], 1
    %114 = vsyncpa [#allocation6], 1
    %115 = vsyncpa [#allocation4], 1

</llo_original>
